<compile_context>
chip_gen: v5e
topology: v5e:2x2
jax: 0.10.0
libtpu: 0.0.40
codegen_flags: <defaults>
</compile_context>

<pallas_src>
import jax
import jax.numpy as jnp
from jax import lax
from jax.experimental import pallas as pl
from jax.experimental.pallas import tpu as pltpu


def _gelu_exact(x):
    # Matches torch.nn.GELU() default (erf-based, not tanh approximation).
    return 0.5 * x * (1.0 + lax.erf(x * jnp.float32(0.7071067811865476)))


def _mlp_kernel(x_ref, w1_ref, b1_ref, w2_ref, b2_ref, o_ref, acc_ref):
    # x_ref : (tm, C_in)    token tile (native dtype)
    # w1_ref: (C_in, th)    fc1 weight slice (transposed vs torch layout)
    # b1_ref: (1, th)
    # w2_ref: (th, C_out)   fc2 weight slice (transposed vs torch layout)
    # b2_ref: (1, C_out)
    # o_ref : (tm, C_out)
    # acc_ref: (tm, C_out) f32 accumulator (scratch, persists across j)
    j = pl.program_id(1)

    @pl.when(j == 0)
    def _init():
        acc_ref[...] = jnp.zeros_like(acc_ref)

    # GEMM1: native-dtype operands on the MXU, f32 accumulation.
    h = jnp.dot(x_ref[...], w1_ref[...], preferred_element_type=jnp.float32)
    h = h + b1_ref[...].astype(jnp.float32)
    h = _gelu_exact(h)
    # Cast once to the GEMM2 operand dtype (no second f32 round trip of h).
    # TODO(synk): dropout is a no-op here (drop=0.0 / eval mode).
    acc_ref[...] += jnp.dot(h.astype(w2_ref.dtype), w2_ref[...],
                            preferred_element_type=jnp.float32)

    @pl.when(j == pl.num_programs(1) - 1)
    def _finalize():
        o_ref[...] = (acc_ref[...] + b2_ref[...].astype(jnp.float32)
                      ).astype(o_ref.dtype)


def _round_up(x, m):
    return ((x + m - 1) // m) * m


def _sublane(dtype):
    # Sublane packing: 8 for 4-byte, 16 for 2-byte, 32 for 1-byte dtypes.
    return max(8, 32 // jnp.dtype(dtype).itemsize)


def _vmem_capacity_bytes():
    try:
        return int(pltpu.get_tpu_info().vmem_capacity_bytes)
    except Exception:
        return 64 << 20  # conservative (v7x per-TensorCore VMEM)


def mlp_pallas(x, w1, b1, w2, b2, *, tm=None, th=1024, vmem_limit_bytes=None):
    """x: (B, N, C_in); w1: (C_in, H); b1: (H,); w2: (H, C_out); b2: (C_out,)."""
    B, N, C_in = x.shape
    H = w1.shape[1]
    C_out = w2.shape[1]
    M = B * N

    vmem_cap = _vmem_capacity_bytes()

    # ---- token tile ---------------------------------------------------------
    if tm is None:
        # Bigger tile on 128 MiB parts (v5e/v6e) when H is moderate; 512 on v7x.
        tm = 1024 if (vmem_cap >= (96 << 20) and H <= 3072) else 512
    sub = _sublane(x.dtype)
    tm_eff = min(tm, _round_up(M, sub))
    if M > sub:
        # Keep >=2 token grid steps so v7x's 2 TensorCores both get work.
        tm_eff = min(tm_eff, _round_up(pl.cdiv(M, 2), sub))
    tm_eff = max(tm_eff, sub)
    M_pad = _round_up(M, tm_eff)

    # ---- hidden tile --------------------------------------------------------
    if H <= th:
        th_eff, H_pad = H, H           # fully resident, single reduction step
    else:
        th_eff = _round_up(th, 128)    # lane-aligned streamed slices
        H_pad = _round_up(H, th_eff)

    # ---- padding (zero rows/cols contribute exactly zero) -------------------
    x2 = x.reshape(M, C_in)
    if M_pad != M:
        x2 = jnp.pad(x2, ((0, M_pad - M), (0, 0)))
    w1p, b1p, w2p = w1, b1.reshape(1, H), w2
    if H_pad != H:
        w1p = jnp.pad(w1p, ((0, 0), (0, H_pad - H)))
        b1p = jnp.pad(b1p, ((0, 0), (0, H_pad - H)))
        w2p = jnp.pad(w2p, ((0, H_pad - H), (0, 0)))
    b2p = b2.reshape(1, C_out)

    n_m = M_pad // tm_eff
    n_h = H_pad // th_eff

    # ---- VMEM budget (generation-aware) --------------------------------------
    if vmem_limit_bytes is None:
        xsz = jnp.dtype(x.dtype).itemsize
        wsz = jnp.dtype(w1.dtype).itemsize
        w_bytes = 2 * (C_in * th_eff * wsz + th_eff * 4
                       + th_eff * C_out * wsz + C_out * 4)
        act_bytes = 2 * tm_eff * (C_in + C_out) * xsz
        tmp_bytes = 2 * tm_eff * th_eff * 4 + tm_eff * C_out * 4
        est = int(1.3 * (w_bytes + act_bytes + tmp_bytes)) + (4 << 20)
        cap = int(vmem_cap * 0.8)   # ~52 MiB on v7x, ~104 MiB on v5e/v6e
        vmem_limit_bytes = min(max(32 << 20, est), cap)

    # ---- advisory cost estimate for the XLA scheduler ------------------------
    cost = pl.CostEstimate(
        flops=2 * M_pad * (C_in * H_pad + H_pad * C_out),
        transcendentals=M_pad * H_pad,
        bytes_accessed=(x2.size * x2.dtype.itemsize
                        + w1p.size * w1p.dtype.itemsize
                        + w2p.size * w2p.dtype.itemsize
                        + b1p.size * b1p.dtype.itemsize
                        + b2p.size * b2p.dtype.itemsize
                        + M_pad * C_out * jnp.dtype(x.dtype).itemsize))

    def _run(single_buffer_constants):
        def spec(shape, imap, constant=False):
            if single_buffer_constants and constant:
                # Constant index_map -> never re-fetched; single buffer frees
                # ~1x the block footprint of VMEM with zero perf cost.
                return pl.BlockSpec(shape, imap, pipeline_mode=pl.Buffered(1))
            return pl.BlockSpec(shape, imap)

        h_const = (n_h == 1)  # weight slices never change if H grid is trivial
        in_specs = [
            spec((tm_eff, C_in), lambda i, j: (i, 0)),
            spec((C_in, th_eff), lambda i, j: (0, j), constant=h_const),
            spec((1, th_eff), lambda i, j: (0, j), constant=h_const),
            spec((th_eff, C_out), lambda i, j: (j, 0), constant=h_const),
            spec((1, C_out), lambda i, j: (0, 0), constant=True),
        ]
        out_specs = pl.BlockSpec((tm_eff, C_out), lambda i, j: (i, 0))
        return pl.pallas_call(
            _mlp_kernel,
            out_shape=jax.ShapeDtypeStruct((M_pad, C_out), x.dtype),
            grid_spec=pltpu.PrefetchScalarGridSpec(
                num_scalar_prefetch=0,
                grid=(n_m, n_h),
                in_specs=in_specs,
                out_specs=out_specs,
                scratch_shapes=[pltpu.VMEM((tm_eff, C_out), jnp.float32)],
            ),
            compiler_params=pltpu.CompilerParams(
                dimension_semantics=("parallel", "arbitrary"),
                vmem_limit_bytes=vmem_limit_bytes),
            cost_estimate=cost,
        )(x2, w1p, b1p, w2p, b2p)

    if hasattr(pl, "Buffered"):
        try:
            out2 = _run(True)
        except Exception:
            # pipeline_mode=pl.Buffered(1) unsupported in this build; fall back
            # to default double-buffered specs (correctness identical).
            out2 = _run(False)
    else:
        out2 = _run(False)

    if M_pad != M:
        out2 = out2[:M]
    return out2.reshape(B, N, C_out)


def mlp_reference(x, w1, b1, w2, b2):
    xf = x.astype(jnp.float32)
    h = jnp.einsum("bnc,ch->bnh", xf, w1.astype(jnp.float32)) + b1.astype(jnp.float32)
    h = _gelu_exact(h)
    y = jnp.einsum("bnh,ho->bno", h, w2.astype(jnp.float32)) + b2.astype(jnp.float32)
    return y.astype(x.dtype)


if __name__ == "__main__":
    in_features = 16
    hidden_features = 32
    out_features = in_features  # module default: out_features = in_features

    key = jax.random.PRNGKey(0)
    kx, kw1, kb1, kw2, kb2, kw1b, kb1b, kw2b = jax.random.split(key, 8)

    # torch Linear stores (out,in); we keep the transposed (in,out) layout so
    # the kernel does x @ W directly.
    w1 = jax.random.normal(kw1, (in_features, hidden_features), jnp.float32) * 0.05
    b1 = jax.random.normal(kb1, (hidden_features,), jnp.float32) * 0.05
    w2 = jax.random.normal(kw2, (hidden_features, out_features), jnp.float32) * 0.05
    b2 = jax.random.normal(kb2, (out_features,), jnp.float32) * 0.05

    # Case 1: token count divisible by 8.
    B, N = 2, 8
    x = jax.random.normal(kx, (B, N, in_features), dtype=jnp.float32)
    y = jax.block_until_ready(mlp_pallas(x, w1, b1, w2, b2))
    y_ref = mlp_reference(x, w1, b1, w2, b2)
    assert y.shape == (B, N, out_features)
    assert jnp.allclose(y, y_ref, atol=1e-5, rtol=1e-5), "mismatch (case 1)"

    # Case 2: ragged token count (padding / tail path).
    B2, N2 = 2, 13
    x_r = jax.random.normal(jax.random.PRNGKey(1), (B2, N2, in_features), jnp.float32)
    y2 = jax.block_until_ready(mlp_pallas(x_r, w1, b1, w2, b2))
    y2_ref = mlp_reference(x_r, w1, b1, w2, b2)
    assert y2.shape == (B2, N2, out_features)
    assert jnp.allclose(y2, y2_ref, atol=1e-5, rtol=1e-5), "mismatch (case 2)"

    # Case 3: hidden-dim tiling path (H > th -> multi-step reduction axis).
    H_big = 256
    w1b = jax.random.normal(kw1b, (in_features, H_big), jnp.float32) * 0.05
    b1b = jax.random.normal(kb1b, (H_big,), jnp.float32) * 0.05
    w2b = jax.random.normal(kw2b, (H_big, out_features), jnp.float32) * 0.05
    y3 = jax.block_until_ready(mlp_pallas(x, w1b, b1b, w2b, b2, th=128))
    y3_ref = mlp_reference(x, w1b, b1b, w2b, b2)
    assert jnp.allclose(y3, y3_ref, atol=2e-3, rtol=2e-3), "mismatch (case 3)"

    # Case 4: bf16 operands (native-dtype MXU feed, f32 accumulation).
    xb = x.astype(jnp.bfloat16)
    w1h, b1h = w1.astype(jnp.bfloat16), b1.astype(jnp.bfloat16)
    w2h, b2h = w2.astype(jnp.bfloat16), b2.astype(jnp.bfloat16)
    y4 = jax.block_until_ready(mlp_pallas(xb, w1h, b1h, w2h, b2h))
    y4_ref = mlp_reference(xb, w1h, b1h, w2h, b2h)
    assert y4.dtype == jnp.bfloat16
    assert jnp.allclose(y4.astype(jnp.float32), y4_ref.astype(jnp.float32),
                        atol=3e-2, rtol=3e-2), "mismatch (case 4)"

    print("KERNEL_OK")
</pallas_src>

<mosaic_0001>
module attributes {stable_mosaic.version = 11 : i64} {
  func.func @_mlp_kernel(%arg0: i32, %arg1: i32, %arg2: memref<8x16xf32, #tpu.memory_space<vmem>>, %arg3: memref<16x32xf32, #tpu.memory_space<vmem>>, %arg4: memref<1x32xf32, #tpu.memory_space<vmem>>, %arg5: memref<32x16xf32, #tpu.memory_space<vmem>>, %arg6: memref<1x16xf32, #tpu.memory_space<vmem>>, %arg7: memref<8x16xf32, #tpu.memory_space<vmem>>, %arg8: memref<8x16xf32, #tpu.memory_space<vmem>>) attributes {dimension_semantics = [#tpu.dimension_semantics<parallel>, #tpu.dimension_semantics<arbitrary>], iteration_bounds = array<i64: 2, 1>, scalar_prefetch = 0 : i64, scratch_operands = 1 : i64, tpu.core_type = #tpu.core_type<tc>, window_params = [{transform_indices = @transform_0, window_bounds = array<i64: 8, 16>}, {pipeline_mode = #tpu.pipeline_mode<synchronous>, transform_indices = @transform_1, window_bounds = array<i64: 16, 32>}, {pipeline_mode = #tpu.pipeline_mode<synchronous>, transform_indices = @transform_2, window_bounds = array<i64: 1, 32>}, {pipeline_mode = #tpu.pipeline_mode<synchronous>, transform_indices = @transform_3, window_bounds = array<i64: 32, 16>}, {pipeline_mode = #tpu.pipeline_mode<synchronous>, transform_indices = @transform_4, window_bounds = array<i64: 1, 16>}, {transform_indices = @transform_5, window_bounds = array<i64: 8, 16>}]} {
    %c0_i32 = arith.constant 0 : i32
    %0 = arith.cmpi eq, %arg1, %c0_i32 : i32
    %1 = arith.extui %0 : i1 to i32
    %c0_i32_0 = arith.constant 0 : i32
    %2 = arith.cmpi ne, %1, %c0_i32_0 : i32
    scf.if %2 {
      %cst_18 = arith.constant 0.000000e+00 : f32
      %25 = vector.broadcast %cst_18 : f32 to vector<8x16xf32>
      %c0_19 = arith.constant 0 : index
      %c0_20 = arith.constant 0 : index
      %26 = vector.load %arg8[%c0_19, %c0_20] : memref<8x16xf32, #tpu.memory_space<vmem>>, vector<8x16xf32>
      tpu.vector_store %arg8[%c0_19, %c0_20], %25 {strides = array<i32>} : memref<8x16xf32, #tpu.memory_space<vmem>>, vector<8x16xf32>,
    } else {
    }
    %c0 = arith.constant 0 : index
    %c0_1 = arith.constant 0 : index
    %3 = vector.load %arg2[%c0, %c0_1] : memref<8x16xf32, #tpu.memory_space<vmem>>, vector<8x16xf32>
    %c0_2 = arith.constant 0 : index
    %c0_3 = arith.constant 0 : index
    %4 = vector.load %arg3[%c0_2, %c0_3] : memref<16x32xf32, #tpu.memory_space<vmem>>, vector<16x32xf32>
    %cst = arith.constant dense<0.000000e+00> : vector<8x32xf32>
    %5 = tpu.matmul %3, %4, %cst {dimension_numbers = #tpu.dot_dimension_numbers<[1], [0], [0], [1], [0, 0, 1, 1], [], []>} : vector<8x16xf32>, vector<16x32xf32>, vector<8x32xf32> -> vector<8x32xf32>
    %c0_4 = arith.constant 0 : index
    %c0_5 = arith.constant 0 : index
    %6 = vector.load %arg4[%c0_4, %c0_5] : memref<1x32xf32, #tpu.memory_space<vmem>>, vector<1x32xf32>
    %7 = vector.broadcast %6 : vector<1x32xf32> to vector<8x32xf32>
    %8 = arith.addf %5, %7 : vector<8x32xf32>
    %cst_6 = arith.constant 5.000000e-01 : f32
    %9 = vector.broadcast %cst_6 : f32 to vector<8x32xf32>
    %10 = arith.mulf %9, %8 : vector<8x32xf32>
    %cst_7 = arith.constant 0.707106769 : f32
    %11 = vector.broadcast %cst_7 : f32 to vector<8x32xf32>
    %12 = arith.mulf %8, %11 : vector<8x32xf32>
    %13 = math.erf %12 : vector<8x32xf32>
    %cst_8 = arith.constant 1.000000e+00 : f32
    %14 = vector.broadcast %cst_8 : f32 to vector<8x32xf32>
    %15 = arith.addf %14, %13 : vector<8x32xf32>
    %16 = arith.mulf %10, %15 : vector<8x32xf32>
    %c0_9 = arith.constant 0 : index
    %c0_10 = arith.constant 0 : index
    %17 = vector.load %arg8[%c0_9, %c0_10] : memref<8x16xf32, #tpu.memory_space<vmem>>, vector<8x16xf32>
    %c0_11 = arith.constant 0 : index
    %c0_12 = arith.constant 0 : index
    %18 = vector.load %arg5[%c0_11, %c0_12] : memref<32x16xf32, #tpu.memory_space<vmem>>, vector<32x16xf32>
    %cst_13 = arith.constant dense<0.000000e+00> : vector<8x16xf32>
    %19 = tpu.matmul %16, %18, %cst_13 {dimension_numbers = #tpu.dot_dimension_numbers<[1], [0], [0], [1], [0, 0, 1, 1], [], []>} : vector<8x32xf32>, vector<32x16xf32>, vector<8x16xf32> -> vector<8x16xf32>
    %20 = arith.addf %17, %19 : vector<8x16xf32>
    %c0_14 = arith.constant 0 : index
    %c0_15 = arith.constant 0 : index
    %21 = vector.load %arg8[%c0_14, %c0_15] : memref<8x16xf32, #tpu.memory_space<vmem>>, vector<8x16xf32>
    tpu.vector_store %arg8[%c0_14, %c0_15], %20 {strides = array<i32>} : memref<8x16xf32, #tpu.memory_space<vmem>>, vector<8x16xf32>,
    %c0_i32_16 = arith.constant 0 : i32
    %22 = arith.cmpi eq, %arg1, %c0_i32_16 : i32
    %23 = arith.extui %22 : i1 to i32
    %c0_i32_17 = arith.constant 0 : i32
    %24 = arith.cmpi ne, %23, %c0_i32_17 : i32
    scf.if %24 {
      %c0_18 = arith.constant 0 : index
      %c0_19 = arith.constant 0 : index
      %25 = vector.load %arg8[%c0_18, %c0_19] : memref<8x16xf32, #tpu.memory_space<vmem>>, vector<8x16xf32>
      %c0_20 = arith.constant 0 : index
      %c0_21 = arith.constant 0 : index
      %26 = vector.load %arg6[%c0_20, %c0_21] : memref<1x16xf32, #tpu.memory_space<vmem>>, vector<1x16xf32>
      %27 = vector.broadcast %26 : vector<1x16xf32> to vector<8x16xf32>
      %28 = arith.addf %25, %27 : vector<8x16xf32>
      %c0_22 = arith.constant 0 : index
      %c0_23 = arith.constant 0 : index
      %29 = vector.load %arg7[%c0_22, %c0_23] : memref<8x16xf32, #tpu.memory_space<vmem>>, vector<8x16xf32>
      tpu.vector_store %arg7[%c0_22, %c0_23], %28 {strides = array<i32>} : memref<8x16xf32, #tpu.memory_space<vmem>>, vector<8x16xf32>,
    } else {
    }
    return
  }
  func.func @transform_0(%arg0: i32, %arg1: i32) -> (i32, i32) {
    %c0_i32 = arith.constant 0 : i32
    %c0_i32_0 = arith.constant 0 : i32
    return %arg0, %c0_i32 : i32, i32
  }
  func.func @transform_1(%arg0: i32, %arg1: i32) -> (i32, i32) {
    %c0_i32 = arith.constant 0 : i32
    %c0_i32_0 = arith.constant 0 : i32
    return %c0_i32, %arg1 : i32, i32
  }
  func.func @transform_2(%arg0: i32, %arg1: i32) -> (i32, i32) {
    %c0_i32 = arith.constant 0 : i32
    %c0_i32_0 = arith.constant 0 : i32
    return %c0_i32, %arg1 : i32, i32
  }
  func.func @transform_3(%arg0: i32, %arg1: i32) -> (i32, i32) {
    %c0_i32 = arith.constant 0 : i32
    %c0_i32_0 = arith.constant 0 : i32
    return %arg1, %c0_i32 : i32, i32
  }
  func.func @transform_4(%arg0: i32, %arg1: i32) -> (i32, i32) {
    %c0_i32 = arith.constant 0 : i32
    %c0_i32_0 = arith.constant 0 : i32
    %c0_i32_1 = arith.constant 0 : i32
    return %c0_i32, %c0_i32_0 : i32, i32
  }
  func.func @transform_5(%arg0: i32, %arg1: i32) -> (i32, i32) {
    %c0_i32 = arith.constant 0 : i32
    %c0_i32_0 = arith.constant 0 : i32
    return %arg0, %c0_i32 : i32, i32
  }
}

module attributes {stable_mosaic.version = 11 : i64} {
  func.func @_mlp_kernel(%arg0: i32, %arg1: i32, %arg2: memref<8x16xf32, #tpu.memory_space<vmem>>, %arg3: memref<16x32xf32, #tpu.memory_space<vmem>>, %arg4: memref<1x32xf32, #tpu.memory_space<vmem>>, %arg5: memref<32x16xf32, #tpu.memory_space<vmem>>, %arg6: memref<1x16xf32, #tpu.memory_space<vmem>>, %arg7: memref<8x16xf32, #tpu.memory_space<vmem>>, %arg8: memref<8x16xf32, #tpu.memory_space<vmem>>) attributes {dimension_semantics = [#tpu.dimension_semantics<parallel>, #tpu.dimension_semantics<arbitrary>], iteration_bounds = array<i64: 2, 1>, scalar_prefetch = 0 : i64, scratch_operands = 1 : i64, tpu.core_type = #tpu.core_type<tc>, window_params = [{transform_indices = @transform_0, window_bounds = array<i64: 8, 16>}, {transform_indices = @transform_1, window_bounds = array<i64: 16, 32>}, {transform_indices = @transform_2, window_bounds = array<i64: 1, 32>}, {transform_indices = @transform_3, window_bounds = array<i64: 32, 16>}, {pipeline_mode = #tpu.pipeline_mode<synchronous>, transform_indices = @transform_4, window_bounds = array<i64: 1, 16>}, {transform_indices = @transform_5, window_bounds = array<i64: 8, 16>}]} {
    %c0_i32 = arith.constant 0 : i32
    %0 = arith.cmpi eq, %arg1, %c0_i32 : i32
    %1 = arith.extui %0 : i1 to i32
    %c0_i32_0 = arith.constant 0 : i32
    %2 = arith.cmpi ne, %1, %c0_i32_0 : i32
    scf.if %2 {
      %cst_18 = arith.constant 0.000000e+00 : f32
      %25 = vector.broadcast %cst_18 : f32 to vector<8x16xf32>
      %c0_19 = arith.constant 0 : index
      %c0_20 = arith.constant 0 : index
      %26 = vector.load %arg8[%c0_19, %c0_20] : memref<8x16xf32, #tpu.memory_space<vmem>>, vector<8x16xf32>
      tpu.vector_store %arg8[%c0_19, %c0_20], %25 {strides = array<i32>} : memref<8x16xf32, #tpu.memory_space<vmem>>, vector<8x16xf32>,
    } else {
    }
    %c0 = arith.constant 0 : index
    %c0_1 = arith.constant 0 : index
    %3 = vector.load %arg2[%c0, %c0_1] : memref<8x16xf32, #tpu.memory_space<vmem>>, vector<8x16xf32>
    %c0_2 = arith.constant 0 : index
    %c0_3 = arith.constant 0 : index
    %4 = vector.load %arg3[%c0_2, %c0_3] : memref<16x32xf32, #tpu.memory_space<vmem>>, vector<16x32xf32>
    %cst = arith.constant dense<0.000000e+00> : vector<8x32xf32>
    %5 = tpu.matmul %3, %4, %cst {dimension_numbers = #tpu.dot_dimension_numbers<[1], [0], [0], [1], [0, 0, 1, 1], [], []>} : vector<8x16xf32>, vector<16x32xf32>, vector<8x32xf32> -> vector<8x32xf32>
    %c0_4 = arith.constant 0 : index
    %c0_5 = arith.constant 0 : index
    %6 = vector.load %arg4[%c0_4, %c0_5] : memref<1x32xf32, #tpu.memory_space<vmem>>, vector<1x32xf32>
    %7 = vector.broadcast %6 : vector<1x32xf32> to vector<8x32xf32>
    %8 = arith.addf %5, %7 : vector<8x32xf32>
    %cst_6 = arith.constant 5.000000e-01 : f32
    %9 = vector.broadcast %cst_6 : f32 to vector<8x32xf32>
    %10 = arith.mulf %9, %8 : vector<8x32xf32>
    %cst_7 = arith.constant 0.707106769 : f32
    %11 = vector.broadcast %cst_7 : f32 to vector<8x32xf32>
    %12 = arith.mulf %8, %11 : vector<8x32xf32>
    %13 = math.erf %12 : vector<8x32xf32>
    %cst_8 = arith.constant 1.000000e+00 : f32
    %14 = vector.broadcast %cst_8 : f32 to vector<8x32xf32>
    %15 = arith.addf %14, %13 : vector<8x32xf32>
    %16 = arith.mulf %10, %15 : vector<8x32xf32>
    %c0_9 = arith.constant 0 : index
    %c0_10 = arith.constant 0 : index
    %17 = vector.load %arg8[%c0_9, %c0_10] : memref<8x16xf32, #tpu.memory_space<vmem>>, vector<8x16xf32>
    %c0_11 = arith.constant 0 : index
    %c0_12 = arith.constant 0 : index
    %18 = vector.load %arg5[%c0_11, %c0_12] : memref<32x16xf32, #tpu.memory_space<vmem>>, vector<32x16xf32>
    %cst_13 = arith.constant dense<0.000000e+00> : vector<8x16xf32>
    %19 = tpu.matmul %16, %18, %cst_13 {dimension_numbers = #tpu.dot_dimension_numbers<[1], [0], [0], [1], [0, 0, 1, 1], [], []>} : vector<8x32xf32>, vector<32x16xf32>, vector<8x16xf32> -> vector<8x16xf32>
    %20 = arith.addf %17, %19 : vector<8x16xf32>
    %c0_14 = arith.constant 0 : index
    %c0_15 = arith.constant 0 : index
    %21 = vector.load %arg8[%c0_14, %c0_15] : memref<8x16xf32, #tpu.memory_space<vmem>>, vector<8x16xf32>
    tpu.vector_store %arg8[%c0_14, %c0_15], %20 {strides = array<i32>} : memref<8x16xf32, #tpu.memory_space<vmem>>, vector<8x16xf32>,
    %c0_i32_16 = arith.constant 0 : i32
    %22 = arith.cmpi eq, %arg1, %c0_i32_16 : i32
    %23 = arith.extui %22 : i1 to i32
    %c0_i32_17 = arith.constant 0 : i32
    %24 = arith.cmpi ne, %23, %c0_i32_17 : i32
    scf.if %24 {
      %c0_18 = arith.constant 0 : index
      %c0_19 = arith.constant 0 : index
      %25 = vector.load %arg8[%c0_18, %c0_19] : memref<8x16xf32, #tpu.memory_space<vmem>>, vector<8x16xf32>
      %c0_20 = arith.constant 0 : index
      %c0_21 = arith.constant 0 : index
      %26 = vector.load %arg6[%c0_20, %c0_21] : memref<1x16xf32, #tpu.memory_space<vmem>>, vector<1x16xf32>
      %27 = vector.broadcast %26 : vector<1x16xf32> to vector<8x16xf32>
      %28 = arith.addf %25, %27 : vector<8x16xf32>
      %c0_22 = arith.constant 0 : index
      %c0_23 = arith.constant 0 : index
      %29 = vector.load %arg7[%c0_22, %c0_23] : memref<8x16xf32, #tpu.memory_space<vmem>>, vector<8x16xf32>
      tpu.vector_store %arg7[%c0_22, %c0_23], %28 {strides = array<i32>} : memref<8x16xf32, #tpu.memory_space<vmem>>, vector<8x16xf32>,
    } else {
    }
    return
  }
  func.func @transform_0(%arg0: i32, %arg1: i32) -> (i32, i32) {
    %c0_i32 = arith.constant 0 : i32
    %c0_i32_0 = arith.constant 0 : i32
    return %arg0, %c0_i32 : i32, i32
  }
  func.func @transform_1(%arg0: i32, %arg1: i32) -> (i32, i32) {
    %c0_i32 = arith.constant 0 : i32
    %c0_i32_0 = arith.constant 0 : i32
    return %c0_i32, %arg1 : i32, i32
  }
  func.func @transform_2(%arg0: i32, %arg1: i32) -> (i32, i32) {
    %c0_i32 = arith.constant 0 : i32
    %c0_i32_0 = arith.constant 0 : i32
    return %c0_i32, %arg1 : i32, i32
  }
  func.func @transform_3(%arg0: i32, %arg1: i32) -> (i32, i32) {
    %c0_i32 = arith.constant 0 : i32
    %c0_i32_0 = arith.constant 0 : i32
    return %arg1, %c0_i32 : i32, i32
  }
  func.func @transform_4(%arg0: i32, %arg1: i32) -> (i32, i32) {
    %c0_i32 = arith.constant 0 : i32
    %c0_i32_0 = arith.constant 0 : i32
    %c0_i32_1 = arith.constant 0 : i32
    return %c0_i32, %c0_i32_0 : i32, i32
  }
  func.func @transform_5(%arg0: i32, %arg1: i32) -> (i32, i32) {
    %c0_i32 = arith.constant 0 : i32
    %c0_i32_0 = arith.constant 0 : i32
    return %arg0, %c0_i32 : i32, i32
  }
}

</mosaic_0001>

<llo_original>
// kernel: tpu_custom_call.1
$region0: #{tpu_custom_call.1}
  #allocation0 [shape = 'u32[]', space=smem, size = 0x4, offset = 0x4, fixed_abs, tag = 'smem constant byte address 0x4 - core index']
  #allocation1 [shape = 'u32[72,128]{1,0:T(1,128)}', space=vmem, size = 0x9000, scoped, tag = 'internal scratch']
  #allocation2 [shape = 'f32[8,16]{1,0:T(8,128)}', space=vmem, size = 0x1000, scoped, tag = 'scratch operand']
  %s0 = inlined_call_operand.vmem [shape: f32[16,16], index: 0, kind: input, shape index: {}]
  %s1 = inlined_call_operand.vmem [shape: f32[16,32], index: 1, kind: input, shape index: {}]
  %s2 = inlined_call_operand.vmem [shape: f32[1,32], index: 2, kind: input, shape index: {}]
  %s3 = inlined_call_operand.vmem [shape: f32[32,16], index: 3, kind: input, shape index: {}]
  %s4 = inlined_call_operand.vmem [shape: f32[1,16], index: 4, kind: input, shape index: {}]
  %s5 = inlined_call_operand.hbm [shape: f32[16,16], index: 5, kind: output, shape index: {}]
  %s6 = sld [smem:[#allocation0]]
  $region61: #{tpu_custom_call.1} parent=0
    _
  %s8 = ssub.s32 1, %s6
  %s9 = scalar_select 0, %s8, %s6
  $region1: #{tpu_custom_call.1} parent=0
    #allocation3 [shape = 'u8[8192]{0}', space=vmem, size = 0x2000, scoped, tag = 'output window, operand 0']
    #allocation4 [shape = 's32[2]{0}', space=sflag, size = 0x8, scoped, tag = 'scoped memory for tpu_custom_call.1']
    %10 = vsyncpa [#allocation4], 0
    %s11 = scalar_lea.sflag [#allocation4], 1
    %12 = vsyncpa %s11, 0
    loop: start=0, step=1, limit=4
    $region2: #{tpu_custom_call.1} parent=1 // loop_pre_header
      _
    $region3: #{tpu_custom_call.1} parent=1 // loop_header
      %s14 = sphi 0, %s18
      %p15 = scmp.ge.s32.totalorder %s14, 4
      %s21 = sphi 0, %s33
      %s22 = sphi 0, %s29
      %s23 = sphi 0, %s21
      %s24 = sphi 0, %s22
      %s25 = sphi 0, %s23
      %s26 = sphi 0, %s24
      %s36 = sphi 0, %s38
      %s39 = sphi 0, %s36
      %s40 = sphi 0, %s39
      %s56 = sphi 0, %s40
      %s62 = sphi 0, %s64
      %s65 = sphi 0, %s62
      %s66 = sphi 0, %s65
      %s82 = sphi 0, %s66
      %s88 = sphi 0, %s90
      %s91 = sphi 0, %s88
      %s92 = sphi 0, %s91
      %s108 = sphi 0, %s92
      %s114 = sphi 0, %s116
      %s117 = sphi 0, %s114
      %s118 = sphi 0, %s117
      %s134 = sphi 0, %s118
      %s138 = sphi 0, %s138
      %s140 = sphi 0, %s138
      %s141 = sphi 0, %s140
      %s155 = sphi 0, %s141
      %s161 = sphi 0, %s163
      %s164 = sphi 0, %s161
      %s165 = sphi 0, %s164
      %s181 = sphi 0, %s165
    $region4: #{tpu_custom_call.1} parent=1 // loop_header_branch
      %17 = sbr.rel (%p15) target = $region8
    $region5: #{tpu_custom_call.1} parent=1 // loop_body
      %s19 = ssub.s32 %s14, 1
      %s20 = ssub.s32 %s14, 2
      %s27 = sadd.s32 1, %s22
      %p28 = scmp.ge.s32.totalorder %s27, 1
      %s29 = scalar_select %p28, 0, %s27
      %s30 = sadd.s32 1, %s21
      %s31 = scalar_select %p28, %s30, %s21
      %p32 = scmp.ge.s32.totalorder %s31, 2
      %s33 = scalar_select %p32, 0, %s31
      %s34 = ssub.s32 %s21, %s33
      %p35 = scmp.eq.s32.totalorder %s34, 0
      %s37 = sadd.s32 %s36, 1
      %s38 = scalar_select %p35, %s36, %s37
      %p41 = pneg %p35
      %p42 = scmp.eq.s32.totalorder %s14, 1
      %p43 = por %p41, %p42
      %p44 = scmp.ne.s32.totalorder %s36, %s39
      %p45 = scmp.eq.s32.totalorder %s14, 0
      %p46 = por %p44, %p45
      %p47 = scmp.ne.s32.totalorder %s36, %s39
      %p48 = scmp.eq.s32.totalorder %s19, 1
      %p49 = por %p47, %p48
      %p50 = scmp.ne.s32.totalorder %s39, %s40
      %p51 = scmp.eq.s32.totalorder %s19, 0
      %p52 = por %p50, %p51
      %p53 = scmp.ne.s32.totalorder %s39, %s40
      %p54 = scmp.eq.s32.totalorder %s20, 1
      %p55 = por %p53, %p54
      %p57 = scmp.ne.s32.totalorder %s40, %s56
      %p58 = scmp.eq.s32.totalorder %s20, 0
      %p59 = por %p57, %p58
      %s60 = ssub.s32 %s22, %s29
      %p61 = scmp.eq.s32.totalorder %s60, 0
      %s63 = sadd.s32 %s62, 1
      %s64 = scalar_select %p61, %s62, %s63
      %p67 = pneg %p61
      %p68 = scmp.eq.s32.totalorder %s14, 1
      %p69 = por %p67, %p68
      %p70 = scmp.ne.s32.totalorder %s62, %s65
      %p71 = scmp.eq.s32.totalorder %s14, 0
      %p72 = por %p70, %p71
      %p73 = scmp.ne.s32.totalorder %s62, %s65
      %p74 = scmp.eq.s32.totalorder %s19, 1
      %p75 = por %p73, %p74
      %p76 = scmp.ne.s32.totalorder %s65, %s66
      %p77 = scmp.eq.s32.totalorder %s19, 0
      %p78 = por %p76, %p77
      %p79 = scmp.ne.s32.totalorder %s65, %s66
      %p80 = scmp.eq.s32.totalorder %s20, 1
      %p81 = por %p79, %p80
      %p83 = scmp.ne.s32.totalorder %s66, %s82
      %p84 = scmp.eq.s32.totalorder %s20, 0
      %p85 = por %p83, %p84
      %s86 = ssub.s32 %s22, %s29
      %p87 = scmp.eq.s32.totalorder %s86, 0
      %s89 = sadd.s32 %s88, 1
      %s90 = scalar_select %p87, %s88, %s89
      %p93 = pneg %p87
      %p94 = scmp.eq.s32.totalorder %s14, 1
      %p95 = por %p93, %p94
      %p96 = scmp.ne.s32.totalorder %s88, %s91
      %p97 = scmp.eq.s32.totalorder %s14, 0
      %p98 = por %p96, %p97
      %p99 = scmp.ne.s32.totalorder %s88, %s91
      %p100 = scmp.eq.s32.totalorder %s19, 1
      %p101 = por %p99, %p100
      %p102 = scmp.ne.s32.totalorder %s91, %s92
      %p103 = scmp.eq.s32.totalorder %s19, 0
      %p104 = por %p102, %p103
      %p105 = scmp.ne.s32.totalorder %s91, %s92
      %p106 = scmp.eq.s32.totalorder %s20, 1
      %p107 = por %p105, %p106
      %p109 = scmp.ne.s32.totalorder %s92, %s108
      %p110 = scmp.eq.s32.totalorder %s20, 0
      %p111 = por %p109, %p110
      %s112 = ssub.s32 %s22, %s29
      %p113 = scmp.eq.s32.totalorder %s112, 0
      %s115 = sadd.s32 %s114, 1
      %s116 = scalar_select %p113, %s114, %s115
      %p119 = pneg %p113
      %p120 = scmp.eq.s32.totalorder %s14, 1
      %p121 = por %p119, %p120
      %p122 = scmp.ne.s32.totalorder %s114, %s117
      %p123 = scmp.eq.s32.totalorder %s14, 0
      %p124 = por %p122, %p123
      %p125 = scmp.ne.s32.totalorder %s114, %s117
      %p126 = scmp.eq.s32.totalorder %s19, 1
      %p127 = por %p125, %p126
      %p128 = scmp.ne.s32.totalorder %s117, %s118
      %p129 = scmp.eq.s32.totalorder %s19, 0
      %p130 = por %p128, %p129
      %p131 = scmp.ne.s32.totalorder %s117, %s118
      %p132 = scmp.eq.s32.totalorder %s20, 1
      %p133 = por %p131, %p132
      %p135 = scmp.ne.s32.totalorder %s118, %s134
      %p136 = scmp.eq.s32.totalorder %s20, 0
      %p137 = por %p135, %p136
      %s139 = sadd.s32 %s138, 1
      %p142 = scmp.eq.s32.totalorder %s14, 1
      %p143 = scmp.ne.s32.totalorder %s138, %s140
      %p144 = scmp.eq.s32.totalorder %s14, 0
      %p145 = por %p143, %p144
      %p146 = scmp.ne.s32.totalorder %s138, %s140
      %p147 = scmp.eq.s32.totalorder %s19, 1
      %p148 = por %p146, %p147
      %p149 = scmp.ne.s32.totalorder %s140, %s141
      %p150 = scmp.eq.s32.totalorder %s19, 0
      %p151 = por %p149, %p150
      %p152 = scmp.ne.s32.totalorder %s140, %s141
      %p153 = scmp.eq.s32.totalorder %s20, 1
      %p154 = por %p152, %p153
      %p156 = scmp.ne.s32.totalorder %s141, %s155
      %p157 = scmp.eq.s32.totalorder %s20, 0
      %p158 = por %p156, %p157
      %s159 = ssub.s32 %s21, %s33
      %p160 = scmp.eq.s32.totalorder %s159, 0
      %s162 = sadd.s32 %s161, 1
      %s163 = scalar_select %p160, %s161, %s162
      %p166 = pneg %p160
      %p167 = scmp.eq.s32.totalorder %s14, 1
      %p168 = por %p166, %p167
      %p169 = scmp.ne.s32.totalorder %s161, %s164
      %p170 = scmp.eq.s32.totalorder %s14, 0
      %p171 = por %p169, %p170
      %p172 = scmp.ne.s32.totalorder %s161, %s164
      %p173 = scmp.eq.s32.totalorder %s19, 1
      %p174 = por %p172, %p173
      %p175 = scmp.ne.s32.totalorder %s164, %s165
      %p176 = scmp.eq.s32.totalorder %s19, 0
      %p177 = por %p175, %p176
      %p178 = scmp.ne.s32.totalorder %s164, %s165
      %p179 = scmp.eq.s32.totalorder %s20, 1
      %p180 = por %p178, %p179
      %p182 = scmp.ne.s32.totalorder %s165, %s181
      %p183 = scmp.eq.s32.totalorder %s20, 0
      %p184 = por %p182, %p183
      %p185 = scmp.le.s32.totalorder 1, %s14
      %p186 = scmp.lt.s32.totalorder %s14, 3
      %p187 = pnand %p185, %p186
      %p188 = pneg %p187
      // Predicated region
      $region9: #{tpu_custom_call.1} parent=5 // pred_check
        _
      $region10: #{tpu_custom_call.1} parent=5 // pred_check_branch
        %190 = sbr.rel (%p187) target = $region12
      $region11: #{tpu_custom_call.1} parent=5 // pred_region
        %s191 = ssub.s32 %s14, 1
        // Predicated region
        $region13: #{tpu_custom_call.1} parent=11 // pred_check
          %p192 = pneg %p78
        $region14: #{tpu_custom_call.1} parent=11 // pred_check_branch
          %194 = sbr.rel (%p192) target = $region16
        $region15: #{tpu_custom_call.1} parent=11 // pred_region
          %p195 = scmp.lt.s32.totalorder %s24, 0
          %s196 = scalar_select %p195, %s24, 0
          %s197 = smul.addr %s196, 8
          %s198 = scalar_lea.vmem %s1, %s197
        $region16: #{tpu_custom_call.1} parent=11 // pred_fallthru
          _
        // Predicated region
        $region17: #{tpu_custom_call.1} parent=11 // pred_check
          %p199 = pneg %p104
        $region18: #{tpu_custom_call.1} parent=11 // pred_check_branch
          %201 = sbr.rel (%p199) target = $region20
        $region19: #{tpu_custom_call.1} parent=11 // pred_region
          %p202 = scmp.lt.s32.totalorder %s24, 0
          %s203 = scalar_select %p202, %s24, 0
          %s204 = scalar_lea.vmem %s2, %s203
        $region20: #{tpu_custom_call.1} parent=11 // pred_fallthru
          _
        // Predicated region
        $region21: #{tpu_custom_call.1} parent=11 // pred_check
          %p205 = pneg %p130
        $region22: #{tpu_custom_call.1} parent=11 // pred_check_branch
          %207 = sbr.rel (%p205) target = $region24
        $region23: #{tpu_custom_call.1} parent=11 // pred_region
          %s208 = smul.u32 4, %s24
          %p209 = scmp.lt.s32.totalorder %s208, 3
          %s210 = scalar_select %p209, %s208, 3
          %s211 = smul.addr %s210, 8
          %s212 = scalar_lea.vmem %s3, %s211
          %s213 = smul.u32 4, %s24
        $region24: #{tpu_custom_call.1} parent=11 // pred_fallthru
          _
        // Predicated region
        $region25: #{tpu_custom_call.1} parent=11 // pred_check
          %p214 = pneg %p151
        $region26: #{tpu_custom_call.1} parent=11 // pred_check_branch
          %216 = sbr.rel (%p214) target = $region28
        $region27: #{tpu_custom_call.1} parent=11 // pred_region
          _
        $region28: #{tpu_custom_call.1} parent=11 // pred_fallthru
          _
      $region12: #{tpu_custom_call.1} parent=5 // pred_fallthru
        _
      %p217 = scmp.lt.s32.totalorder %s14, 2
      // Predicated region
      $region29: #{tpu_custom_call.1} parent=5 // pred_check
        %p218 = pneg %p217
      $region30: #{tpu_custom_call.1} parent=5 // pred_check_branch
        %220 = sbr.rel (%p218) target = $region32
      $region31: #{tpu_custom_call.1} parent=5 // pred_region
        // Predicated region
        $region33: #{tpu_custom_call.1} parent=31 // pred_check
          %p221 = pneg %p46
        $region34: #{tpu_custom_call.1} parent=31 // pred_check_branch
          %223 = sbr.rel (%p221) target = $region36
        $region35: #{tpu_custom_call.1} parent=31 // pred_region
          %p224 = scmp.lt.s32.totalorder %s21, 1
          %s225 = scalar_select %p224, %s21, 1
          %s226 = smul.addr %s225, 8
          %s227 = scalar_lea.vmem %s0, %s226
        $region36: #{tpu_custom_call.1} parent=31 // pred_fallthru
          _
      $region32: #{tpu_custom_call.1} parent=5 // pred_fallthru
        _
      %p228 = scmp.le.s32.totalorder 1, %s14
      %p229 = scmp.lt.s32.totalorder %s14, 3
      %p230 = pnand %p228, %p229
      %p231 = pneg %p230
      // Predicated region
      $region37: #{tpu_custom_call.1} parent=5 // pred_check
        _
      $region38: #{tpu_custom_call.1} parent=5 // pred_check_branch
        %233 = sbr.rel (%p230) target = $region40
      $region39: #{tpu_custom_call.1} parent=5 // pred_region
        %s234 = ssub.s32 %s14, 1
        %p235 = scmp.lt.s32.totalorder %s23, 1
        %s236 = scalar_select %p235, %s23, 1
        %s237 = smul.addr %s236, 8
        %s238 = scalar_lea.vmem %s0, %s237
        %p239 = pneg %p52
        %p240 = pneg %p49
        %p241 = scmp.lt.s32.totalorder %s24, 0
        %s242 = scalar_select %p241, %s24, 0
        %s243 = smul.addr %s242, 8
        %s244 = scalar_lea.vmem %s1, %s243
        %p245 = pneg %p78
        %p246 = pneg %p75
        %p247 = scmp.lt.s32.totalorder %s24, 0
        %s248 = scalar_select %p247, %s24, 0
        %s249 = scalar_lea.vmem %s2, %s248
        %p250 = pneg %p104
        %p251 = pneg %p101
        %s252 = smul.u32 4, %s24
        %p253 = scmp.lt.s32.totalorder %s252, 3
        %s254 = scalar_select %p253, %s252, 3
        %s255 = smul.addr %s254, 8
        %s256 = scalar_lea.vmem %s3, %s255
        %p257 = pneg %p130
        %p258 = pneg %p127
        %p259 = pneg %p151
        %p260 = pneg %p148
        %p261 = pneg %p177
        %p262 = pneg %p174
        %s263 = sand.u32 %s164, 1
        %s264 = scalar_lea.sflag [#allocation4], %s263
        %s265 = sand.u32 %s164, 1
        %s266 = smul.addr %s265, 8
        %s267 = scalar_lea.vmem [#allocation3], %s266
        %p268 = scmp.lt.s32.totalorder %s23, 1
        %s269 = scalar_select %p268, %s23, 1
        %s270 = smul.addr %s269, 8
        %s271 = scalar_lea.vmem %s0, %s270
        %p272 = scmp.lt.s32.totalorder %s24, 0
        %s273 = scalar_select %p272, %s24, 0
        %s274 = smul.addr %s273, 8
        %s275 = scalar_lea.vmem %s1, %s274
        %p276 = scmp.lt.s32.totalorder %s24, 0
        %s277 = scalar_select %p276, %s24, 0
        %s278 = scalar_lea.vmem %s2, %s277
        %s279 = smul.u32 4, %s24
        %p280 = scmp.lt.s32.totalorder %s279, 3
        %s281 = scalar_select %p280, %s279, 3
        %s282 = smul.addr %s281, 8
        %s283 = scalar_lea.vmem %s3, %s282
        %s284 = smul.u32 4, %s24
        %p285 = scmp.eq.s32.totalorder %s24, 0
        // Predicated region
        $region41: #{tpu_custom_call.1} parent=39 // pred_check
          %p286 = pneg %p285
        $region42: #{tpu_custom_call.1} parent=39 // pred_check_branch
          %288 = sbr.rel (%p286) target = $region44
        $region43: #{tpu_custom_call.1} parent=39 // pred_region
          %vm289 = vcmask 130048
          %290 = vst.msk [vmem:[#allocation2] sm:$0xff] %vm289, 0.0
        $region44: #{tpu_custom_call.1} parent=39 // pred_fallthru
          _
        %v291 = vld [vmem:[%s271] sm:$0xff]
        %v292 = vld [vmem:[%s275] sm:$0xff]
        %v293 = vld [vmem:[%s275 + $0x8] sm:$0xff]
        %v294 = vld [vmem:[%s278] sm:$0x1]
        %v296 = vperm.slane %v294, 0
        %vm298 = vcmask 130048
        %v300 = vsel %vm298, %v291, 0
        %302 = vmatpush.msra.mxu0 0.0
        %303 = vmatpush.msra.mxu0 0.0
        %304 = vmatpush.msra.mxu0 0.0
        %305 = vmatpush.msra.mxu0 0.0
        %306 = vmatpush.msra.mxu0 0.0
        %307 = vmatpush.msra.mxu0 0.0
        %308 = vmatpush.msra.mxu0 0.0
        %309 = vmatpush.msra.mxu0 0.0
        %310 = vmatpush.msra.mxu0 0.0
        %311 = vmatpush.msra.mxu0 0.0
        %312 = vmatpush.msra.mxu0 0.0
        %313 = vmatpush.msra.mxu0 0.0
        %314 = vmatpush.msra.mxu0 0.0
        %315 = vmatpush.msra.mxu0 0.0
        %316 = vmatpush.msra.mxu0 %v293
        %317 = vmatpush.msra.mxu0 %v292
        %318 = vmatmul.f32.gmra.mxu0 %v300
        %v319 = vpop.f32.mrf.mxu0
        %v320 = vadd.f32 %v296, %v319
        %321 = vdwg.mxu0
        %v322 = vmul.f32 %v320, 0.5
        %v323 = vmul.f32 %v320, 0.70710677
        %v324 = vmul.f32 %v323, %v323
        %v325 = vmin.f32 16.0, %v324
        %v326 = vmul.f32 %v325, 2.1237322e-06
        %v327 = vadd.f32 %v326, 0.00028619796
        %v328 = vmul.f32 %v325, %v327
        %v329 = vadd.f32 %v328, 0.0036580483
        %v330 = vmul.f32 %v325, %v329
        %v331 = vadd.f32 %v330, 0.05243302
        %v332 = vmul.f32 %v325, %v331
        %v333 = vadd.f32 %v332, 0.18741608
        %v334 = vmul.f32 %v325, %v333
        %v335 = vadd.f32 %v334, 1.1283791
        %v336 = vmul.f32 %v323, %v335
        %v337 = vmul.f32 %v325, 3.8918573e-05
        %v338 = vadd.f32 %v337, 0.001143296
        %v339 = vmul.f32 %v325, %v338
        %v340 = vadd.f32 %v339, 0.014752088
        %v341 = vmul.f32 %v325, %v340
        %v342 = vadd.f32 %v341, 0.112945676
        %v343 = vmul.f32 %v325, %v342
        %v344 = vadd.f32 %v343, 0.4994258
        %v345 = vmul.f32 %v325, %v344
        %v346 = vadd.f32 %v345, 1.0
        %v347 = vrcp.pop %v346
        %v348 = vmul.f32 %v346, %v347
        %v349 = vsub.f32 1.0, %v348
        %v350 = vmul.f32 %v347, %v349
        %v351 = vadd.f32 %v347, %v350
        %vm352 = vweird.f32 %v346
        %vm353 = vweird.f32 %v347
        %vm354 = vmor %vm352, %vm353
        %v355 = vsel %vm354, %v347, %v351
        %v356 = vand.u32 2147483647, %v346
        %vm357 = vcmp.eq.f32.partialorder %v356, 8.507059e+37
        %v358 = vand.u32 %v346, 2147483648
        %v359 = vor.u32 1.1754944e-38, %v358
        %v360 = vsel %vm357, %v359, %v355
        %v361 = vmul.f32 %v336, %v360
        %v362 = vmin.f32 %v361, 1.0
        %v363 = vmax.f32 %v362, -1.0
        %v364 = vadd.f32 %v363, 1.0
        %v365 = vmul.f32 %v322, %v364
        %v366 = vld [vmem:[#allocation2] sm:$0xff]
        %v367 = vld [vmem:[%s283] sm:$0xff]
        %v368 = vld [vmem:[%s283 + $0x8] sm:$0xff]
        %v369 = vld [vmem:[%s283 + $0x10] sm:$0xff]
        %v370 = vld [vmem:[%s283 + $0x18] sm:$0xff]
        %vm371 = vcmask 261120
        %v373 = vsel %vm371, %v365, 0
        %375 = vmatpush.msra.mxu0 0.0
        %376 = vmatpush.msra.mxu0 0.0
        %377 = vmatpush.msra.mxu0 0.0
        %378 = vmatpush.msra.mxu0 0.0
        %379 = vmatpush.msra.mxu0 0.0
        %380 = vmatpush.msra.mxu0 0.0
        %381 = vmatpush.msra.mxu0 0.0
        %382 = vmatpush.msra.mxu0 0.0
        %383 = vmatpush.msra.mxu0 0.0
        %384 = vmatpush.msra.mxu0 0.0
        %385 = vmatpush.msra.mxu0 0.0
        %386 = vmatpush.msra.mxu0 0.0
        %387 = vmatpush.msra.mxu0 %v370
        %388 = vmatpush.msra.mxu0 %v369
        %389 = vmatpush.msra.mxu0 %v368
        %390 = vmatpush.msra.mxu0 %v367
        %391 = vmatmul.f32.gmra.mxu0 %v373
        %v392 = vpop.f32.mrf.mxu0
        %v393 = vadd.f32 0.0, %v392
        %394 = vdwg.mxu0
        %v395 = vadd.f32 %v366, %v393
        %396 = vst.msk [vmem:[#allocation2] sm:$0xff] %vm298, %v395
        // Predicated region
        $region45: #{tpu_custom_call.1} parent=39 // pred_check
          %p397 = pneg %p285
        $region46: #{tpu_custom_call.1} parent=39 // pred_check_branch
          %399 = sbr.rel (%p397) target = $region48
        $region47: #{tpu_custom_call.1} parent=39 // pred_region
          %v400 = vld [vmem:[#allocation2] sm:$0xff]
          %v401 = vld [vmem:[%s4] sm:$0x1]
          %v403 = vperm.slane %v401, 0
          %v405 = vadd.f32 %v400, %v403
          %406 = vst.msk [vmem:[%s267] sm:$0xff] %vm298, %v405
        $region48: #{tpu_custom_call.1} parent=39 // pred_fallthru
          _
        %s407 = sand.u32 %s164, 1
        %s408 = scalar_lea.sflag [#allocation4], %s407
        %s409 = sand.u32 %s164, 1
        %s410 = smul.addr %s409, 8
        %s411 = scalar_lea.vmem [#allocation3], %s410
        // Predicated region
        $region49: #{tpu_custom_call.1} parent=39 // pred_check
          %p412 = pneg %p174
        $region50: #{tpu_custom_call.1} parent=39 // pred_check_branch
          %414 = sbr.rel (%p412) target = $region52
        $region51: #{tpu_custom_call.1} parent=39 // pred_region
          %416 = vsyncadd %s408, 0
          %s417 = smul.addr %s23, 8
          %s418 = scalar_lea.hbm %s5, %s417
          %s420 = sshll.u32 %s411, 4
          %s421 = int_to_ptr.vmem [resolvable:$true] %s420
          %s422 = sshll.u32 %s418, 4
          %s423 = int_to_ptr.hbm [resolvable:$true] %s422
          %425 = dma.vmem_to_hbm [thread:$0]  %s421, 128, %s423, %s408
        $region52: #{tpu_custom_call.1} parent=39 // pred_fallthru
          _
      $region40: #{tpu_custom_call.1} parent=5 // pred_fallthru
        _
      %p426 = scmp.le.s32.totalorder 2, %s14
      // Predicated region
      $region53: #{tpu_custom_call.1} parent=5 // pred_check
        %p427 = pneg %p426
      $region54: #{tpu_custom_call.1} parent=5 // pred_check_branch
        %429 = sbr.rel (%p427) target = $region56
      $region55: #{tpu_custom_call.1} parent=5 // pred_region
        %s430 = ssub.s32 %s14, 2
        // Predicated region
        $region57: #{tpu_custom_call.1} parent=55 // pred_check
          %p431 = pneg %p180
        $region58: #{tpu_custom_call.1} parent=55 // pred_check_branch
          %433 = sbr.rel (%p431) target = $region60
        $region59: #{tpu_custom_call.1} parent=55 // pred_region
          %s434 = sand.u32 %s165, 1
          %s435 = scalar_lea.sflag [#allocation4], %s434
          %s436 = sand.u32 %s165, 1
          %s437 = smul.addr %s436, 8
          %s438 = scalar_lea.vmem [#allocation3], %s437
          %440 = dma.done %s435, 128
        $region60: #{tpu_custom_call.1} parent=55 // pred_fallthru
          _
      $region56: #{tpu_custom_call.1} parent=5 // pred_fallthru
        _
    $region6: #{tpu_custom_call.1} parent=1 // loop_footer
      %s18 = sadd.s32 1, %s14
    $region7: #{tpu_custom_call.1} parent=1 // loop_footer_branch
      %13 = sbr.rel target = $region3
    $region8: #{tpu_custom_call.1} parent=1 // loop_exit
      _
    %441 = vsyncpa [#allocation4], 1
    %s442 = scalar_lea.sflag [#allocation4], 1
    %443 = vsyncpa %s442, 1

// kernel: tpu_custom_call.1
$region0: #{tpu_custom_call.1}
  #allocation0 [shape = 'u32[]', space=smem, size = 0x4, offset = 0x4, fixed_abs, tag = 'smem constant byte address 0x4 - core index']
  #allocation1 [shape = 'u32[72,128]{1,0:T(1,128)}', space=vmem, size = 0x9000, scoped, tag = 'internal scratch']
  #allocation2 [shape = 'f32[8,16]{1,0:T(8,128)}', space=vmem, size = 0x1000, scoped, tag = 'scratch operand']
  %s0 = inlined_call_operand.vmem [shape: f32[16,16], index: 0, kind: input, shape index: {}]
  %s1 = inlined_call_operand.vmem [shape: f32[16,32], index: 1, kind: input, shape index: {}]
  %s2 = inlined_call_operand.vmem [shape: f32[1,32], index: 2, kind: input, shape index: {}]
  %s3 = inlined_call_operand.vmem [shape: f32[32,16], index: 3, kind: input, shape index: {}]
  %s4 = inlined_call_operand.vmem [shape: f32[1,16], index: 4, kind: input, shape index: {}]
  %s5 = inlined_call_operand.hbm [shape: f32[16,16], index: 5, kind: output, shape index: {}]
  %s6 = sld [smem:[#allocation0]]
  $region61: #{tpu_custom_call.1} parent=0
    _
  %s8 = ssub.s32 1, %s6
  %s9 = scalar_select 0, %s8, %s6
  $region1: #{tpu_custom_call.1} parent=0
    #allocation3 [shape = 'u8[8192]{0}', space=vmem, size = 0x2000, scoped, tag = 'output window, operand 0']
    #allocation4 [shape = 's32[2]{0}', space=sflag, size = 0x8, scoped, tag = 'scoped memory for tpu_custom_call.1']
    %10 = vsyncpa [#allocation4], 0
    %s11 = scalar_lea.sflag [#allocation4], 1
    %12 = vsyncpa %s11, 0
    loop: start=0, step=1, limit=4
    $region2: #{tpu_custom_call.1} parent=1 // loop_pre_header
      _
    $region3: #{tpu_custom_call.1} parent=1 // loop_header
      %s14 = sphi 0, %s18
      %p15 = scmp.ge.s32.totalorder %s14, 4
      %s21 = sphi 0, %s33
      %s22 = sphi 0, %s29
      %s23 = sphi 0, %s21
      %s24 = sphi 0, %s22
      %s25 = sphi 0, %s23
      %s26 = sphi 0, %s24
      %s36 = sphi 0, %s38
      %s39 = sphi 0, %s36
      %s40 = sphi 0, %s39
      %s56 = sphi 0, %s40
      %s62 = sphi 0, %s64
      %s65 = sphi 0, %s62
      %s66 = sphi 0, %s65
      %s82 = sphi 0, %s66
      %s88 = sphi 0, %s90
      %s91 = sphi 0, %s88
      %s92 = sphi 0, %s91
      %s108 = sphi 0, %s92
      %s114 = sphi 0, %s116
      %s117 = sphi 0, %s114
      %s118 = sphi 0, %s117
      %s134 = sphi 0, %s118
      %s138 = sphi 0, %s138
      %s140 = sphi 0, %s138
      %s141 = sphi 0, %s140
      %s155 = sphi 0, %s141
      %s161 = sphi 0, %s163
      %s164 = sphi 0, %s161
      %s165 = sphi 0, %s164
      %s181 = sphi 0, %s165
    $region4: #{tpu_custom_call.1} parent=1 // loop_header_branch
      %17 = sbr.rel (%p15) target = $region8
    $region5: #{tpu_custom_call.1} parent=1 // loop_body
      %s19 = ssub.s32 %s14, 1
      %s20 = ssub.s32 %s14, 2
      %s27 = sadd.s32 1, %s22
      %p28 = scmp.ge.s32.totalorder %s27, 1
      %s29 = scalar_select %p28, 0, %s27
      %s30 = sadd.s32 1, %s21
      %s31 = scalar_select %p28, %s30, %s21
      %p32 = scmp.ge.s32.totalorder %s31, 2
      %s33 = scalar_select %p32, 0, %s31
      %s34 = ssub.s32 %s21, %s33
      %p35 = scmp.eq.s32.totalorder %s34, 0
      %s37 = sadd.s32 %s36, 1
      %s38 = scalar_select %p35, %s36, %s37
      %p41 = pneg %p35
      %p42 = scmp.eq.s32.totalorder %s14, 1
      %p43 = por %p41, %p42
      %p44 = scmp.ne.s32.totalorder %s36, %s39
      %p45 = scmp.eq.s32.totalorder %s14, 0
      %p46 = por %p44, %p45
      %p47 = scmp.ne.s32.totalorder %s36, %s39
      %p48 = scmp.eq.s32.totalorder %s19, 1
      %p49 = por %p47, %p48
      %p50 = scmp.ne.s32.totalorder %s39, %s40
      %p51 = scmp.eq.s32.totalorder %s19, 0
      %p52 = por %p50, %p51
      %p53 = scmp.ne.s32.totalorder %s39, %s40
      %p54 = scmp.eq.s32.totalorder %s20, 1
      %p55 = por %p53, %p54
      %p57 = scmp.ne.s32.totalorder %s40, %s56
      %p58 = scmp.eq.s32.totalorder %s20, 0
      %p59 = por %p57, %p58
      %s60 = ssub.s32 %s22, %s29
      %p61 = scmp.eq.s32.totalorder %s60, 0
      %s63 = sadd.s32 %s62, 1
      %s64 = scalar_select %p61, %s62, %s63
      %p67 = pneg %p61
      %p68 = scmp.eq.s32.totalorder %s14, 1
      %p69 = por %p67, %p68
      %p70 = scmp.ne.s32.totalorder %s62, %s65
      %p71 = scmp.eq.s32.totalorder %s14, 0
      %p72 = por %p70, %p71
      %p73 = scmp.ne.s32.totalorder %s62, %s65
      %p74 = scmp.eq.s32.totalorder %s19, 1
      %p75 = por %p73, %p74
      %p76 = scmp.ne.s32.totalorder %s65, %s66
      %p77 = scmp.eq.s32.totalorder %s19, 0
      %p78 = por %p76, %p77
      %p79 = scmp.ne.s32.totalorder %s65, %s66
      %p80 = scmp.eq.s32.totalorder %s20, 1
      %p81 = por %p79, %p80
      %p83 = scmp.ne.s32.totalorder %s66, %s82
      %p84 = scmp.eq.s32.totalorder %s20, 0
      %p85 = por %p83, %p84
      %s86 = ssub.s32 %s22, %s29
      %p87 = scmp.eq.s32.totalorder %s86, 0
      %s89 = sadd.s32 %s88, 1
      %s90 = scalar_select %p87, %s88, %s89
      %p93 = pneg %p87
      %p94 = scmp.eq.s32.totalorder %s14, 1
      %p95 = por %p93, %p94
      %p96 = scmp.ne.s32.totalorder %s88, %s91
      %p97 = scmp.eq.s32.totalorder %s14, 0
      %p98 = por %p96, %p97
      %p99 = scmp.ne.s32.totalorder %s88, %s91
      %p100 = scmp.eq.s32.totalorder %s19, 1
      %p101 = por %p99, %p100
      %p102 = scmp.ne.s32.totalorder %s91, %s92
      %p103 = scmp.eq.s32.totalorder %s19, 0
      %p104 = por %p102, %p103
      %p105 = scmp.ne.s32.totalorder %s91, %s92
      %p106 = scmp.eq.s32.totalorder %s20, 1
      %p107 = por %p105, %p106
      %p109 = scmp.ne.s32.totalorder %s92, %s108
      %p110 = scmp.eq.s32.totalorder %s20, 0
      %p111 = por %p109, %p110
      %s112 = ssub.s32 %s22, %s29
      %p113 = scmp.eq.s32.totalorder %s112, 0
      %s115 = sadd.s32 %s114, 1
      %s116 = scalar_select %p113, %s114, %s115
      %p119 = pneg %p113
      %p120 = scmp.eq.s32.totalorder %s14, 1
      %p121 = por %p119, %p120
      %p122 = scmp.ne.s32.totalorder %s114, %s117
      %p123 = scmp.eq.s32.totalorder %s14, 0
      %p124 = por %p122, %p123
      %p125 = scmp.ne.s32.totalorder %s114, %s117
      %p126 = scmp.eq.s32.totalorder %s19, 1
      %p127 = por %p125, %p126
      %p128 = scmp.ne.s32.totalorder %s117, %s118
      %p129 = scmp.eq.s32.totalorder %s19, 0
      %p130 = por %p128, %p129
      %p131 = scmp.ne.s32.totalorder %s117, %s118
      %p132 = scmp.eq.s32.totalorder %s20, 1
      %p133 = por %p131, %p132
      %p135 = scmp.ne.s32.totalorder %s118, %s134
      %p136 = scmp.eq.s32.totalorder %s20, 0
      %p137 = por %p135, %p136
      %s139 = sadd.s32 %s138, 1
      %p142 = scmp.eq.s32.totalorder %s14, 1
      %p143 = scmp.ne.s32.totalorder %s138, %s140
      %p144 = scmp.eq.s32.totalorder %s14, 0
      %p145 = por %p143, %p144
      %p146 = scmp.ne.s32.totalorder %s138, %s140
      %p147 = scmp.eq.s32.totalorder %s19, 1
      %p148 = por %p146, %p147
      %p149 = scmp.ne.s32.totalorder %s140, %s141
      %p150 = scmp.eq.s32.totalorder %s19, 0
      %p151 = por %p149, %p150
      %p152 = scmp.ne.s32.totalorder %s140, %s141
      %p153 = scmp.eq.s32.totalorder %s20, 1
      %p154 = por %p152, %p153
      %p156 = scmp.ne.s32.totalorder %s141, %s155
      %p157 = scmp.eq.s32.totalorder %s20, 0
      %p158 = por %p156, %p157
      %s159 = ssub.s32 %s21, %s33
      %p160 = scmp.eq.s32.totalorder %s159, 0
      %s162 = sadd.s32 %s161, 1
      %s163 = scalar_select %p160, %s161, %s162
      %p166 = pneg %p160
      %p167 = scmp.eq.s32.totalorder %s14, 1
      %p168 = por %p166, %p167
      %p169 = scmp.ne.s32.totalorder %s161, %s164
      %p170 = scmp.eq.s32.totalorder %s14, 0
      %p171 = por %p169, %p170
      %p172 = scmp.ne.s32.totalorder %s161, %s164
      %p173 = scmp.eq.s32.totalorder %s19, 1
      %p174 = por %p172, %p173
      %p175 = scmp.ne.s32.totalorder %s164, %s165
      %p176 = scmp.eq.s32.totalorder %s19, 0
      %p177 = por %p175, %p176
      %p178 = scmp.ne.s32.totalorder %s164, %s165
      %p179 = scmp.eq.s32.totalorder %s20, 1
      %p180 = por %p178, %p179
      %p182 = scmp.ne.s32.totalorder %s165, %s181
      %p183 = scmp.eq.s32.totalorder %s20, 0
      %p184 = por %p182, %p183
      %p185 = scmp.le.s32.totalorder 1, %s14
      %p186 = scmp.lt.s32.totalorder %s14, 3
      %p187 = pnand %p185, %p186
      %p188 = pneg %p187
      // Predicated region
      $region9: #{tpu_custom_call.1} parent=5 // pred_check
        _
      $region10: #{tpu_custom_call.1} parent=5 // pred_check_branch
        %190 = sbr.rel (%p187) target = $region12
      $region11: #{tpu_custom_call.1} parent=5 // pred_region
        %s191 = ssub.s32 %s14, 1
        // Predicated region
        $region13: #{tpu_custom_call.1} parent=11 // pred_check
          %p192 = pneg %p78
        $region14: #{tpu_custom_call.1} parent=11 // pred_check_branch
          %194 = sbr.rel (%p192) target = $region16
        $region15: #{tpu_custom_call.1} parent=11 // pred_region
          %p195 = scmp.lt.s32.totalorder %s24, 0
          %s196 = scalar_select %p195, %s24, 0
          %s197 = smul.addr %s196, 8
          %s198 = scalar_lea.vmem %s1, %s197
        $region16: #{tpu_custom_call.1} parent=11 // pred_fallthru
          _
        // Predicated region
        $region17: #{tpu_custom_call.1} parent=11 // pred_check
          %p199 = pneg %p104
        $region18: #{tpu_custom_call.1} parent=11 // pred_check_branch
          %201 = sbr.rel (%p199) target = $region20
        $region19: #{tpu_custom_call.1} parent=11 // pred_region
          %p202 = scmp.lt.s32.totalorder %s24, 0
          %s203 = scalar_select %p202, %s24, 0
          %s204 = scalar_lea.vmem %s2, %s203
        $region20: #{tpu_custom_call.1} parent=11 // pred_fallthru
          _
        // Predicated region
        $region21: #{tpu_custom_call.1} parent=11 // pred_check
          %p205 = pneg %p130
        $region22: #{tpu_custom_call.1} parent=11 // pred_check_branch
          %207 = sbr.rel (%p205) target = $region24
        $region23: #{tpu_custom_call.1} parent=11 // pred_region
          %s208 = smul.u32 4, %s24
          %p209 = scmp.lt.s32.totalorder %s208, 3
          %s210 = scalar_select %p209, %s208, 3
          %s211 = smul.addr %s210, 8
          %s212 = scalar_lea.vmem %s3, %s211
          %s213 = smul.u32 4, %s24
        $region24: #{tpu_custom_call.1} parent=11 // pred_fallthru
          _
        // Predicated region
        $region25: #{tpu_custom_call.1} parent=11 // pred_check
          %p214 = pneg %p151
        $region26: #{tpu_custom_call.1} parent=11 // pred_check_branch
          %216 = sbr.rel (%p214) target = $region28
        $region27: #{tpu_custom_call.1} parent=11 // pred_region
          _
        $region28: #{tpu_custom_call.1} parent=11 // pred_fallthru
          _
      $region12: #{tpu_custom_call.1} parent=5 // pred_fallthru
        _
      %p217 = scmp.lt.s32.totalorder %s14, 2
      // Predicated region
      $region29: #{tpu_custom_call.1} parent=5 // pred_check
        %p218 = pneg %p217
      $region30: #{tpu_custom_call.1} parent=5 // pred_check_branch
        %220 = sbr.rel (%p218) target = $region32
      $region31: #{tpu_custom_call.1} parent=5 // pred_region
        // Predicated region
        $region33: #{tpu_custom_call.1} parent=31 // pred_check
          %p221 = pneg %p46
        $region34: #{tpu_custom_call.1} parent=31 // pred_check_branch
          %223 = sbr.rel (%p221) target = $region36
        $region35: #{tpu_custom_call.1} parent=31 // pred_region
          %p224 = scmp.lt.s32.totalorder %s21, 1
          %s225 = scalar_select %p224, %s21, 1
          %s226 = smul.addr %s225, 8
          %s227 = scalar_lea.vmem %s0, %s226
        $region36: #{tpu_custom_call.1} parent=31 // pred_fallthru
          _
      $region32: #{tpu_custom_call.1} parent=5 // pred_fallthru
        _
      %p228 = scmp.le.s32.totalorder 1, %s14
      %p229 = scmp.lt.s32.totalorder %s14, 3
      %p230 = pnand %p228, %p229
      %p231 = pneg %p230
      // Predicated region
      $region37: #{tpu_custom_call.1} parent=5 // pred_check
        _
      $region38: #{tpu_custom_call.1} parent=5 // pred_check_branch
        %233 = sbr.rel (%p230) target = $region40
      $region39: #{tpu_custom_call.1} parent=5 // pred_region
        %s234 = ssub.s32 %s14, 1
        %p235 = scmp.lt.s32.totalorder %s23, 1
        %s236 = scalar_select %p235, %s23, 1
        %s237 = smul.addr %s236, 8
        %s238 = scalar_lea.vmem %s0, %s237
        %p239 = pneg %p52
        %p240 = pneg %p49
        %p241 = scmp.lt.s32.totalorder %s24, 0
        %s242 = scalar_select %p241, %s24, 0
        %s243 = smul.addr %s242, 8
        %s244 = scalar_lea.vmem %s1, %s243
        %p245 = pneg %p78
        %p246 = pneg %p75
        %p247 = scmp.lt.s32.totalorder %s24, 0
        %s248 = scalar_select %p247, %s24, 0
        %s249 = scalar_lea.vmem %s2, %s248
        %p250 = pneg %p104
        %p251 = pneg %p101
        %s252 = smul.u32 4, %s24
        %p253 = scmp.lt.s32.totalorder %s252, 3
        %s254 = scalar_select %p253, %s252, 3
        %s255 = smul.addr %s254, 8
        %s256 = scalar_lea.vmem %s3, %s255
        %p257 = pneg %p130
        %p258 = pneg %p127
        %p259 = pneg %p151
        %p260 = pneg %p148
        %p261 = pneg %p177
        %p262 = pneg %p174
        %s263 = sand.u32 %s164, 1
        %s264 = scalar_lea.sflag [#allocation4], %s263
        %s265 = sand.u32 %s164, 1
        %s266 = smul.addr %s265, 8
        %s267 = scalar_lea.vmem [#allocation3], %s266
        %p268 = scmp.lt.s32.totalorder %s23, 1
        %s269 = scalar_select %p268, %s23, 1
        %s270 = smul.addr %s269, 8
        %s271 = scalar_lea.vmem %s0, %s270
        %p272 = scmp.lt.s32.totalorder %s24, 0
        %s273 = scalar_select %p272, %s24, 0
        %s274 = smul.addr %s273, 8
        %s275 = scalar_lea.vmem %s1, %s274
        %p276 = scmp.lt.s32.totalorder %s24, 0
        %s277 = scalar_select %p276, %s24, 0
        %s278 = scalar_lea.vmem %s2, %s277
        %s279 = smul.u32 4, %s24
        %p280 = scmp.lt.s32.totalorder %s279, 3
        %s281 = scalar_select %p280, %s279, 3
        %s282 = smul.addr %s281, 8
        %s283 = scalar_lea.vmem %s3, %s282
        %s284 = smul.u32 4, %s24
        %p285 = scmp.eq.s32.totalorder %s24, 0
        // Predicated region
        $region41: #{tpu_custom_call.1} parent=39 // pred_check
          %p286 = pneg %p285
        $region42: #{tpu_custom_call.1} parent=39 // pred_check_branch
          %288 = sbr.rel (%p286) target = $region44
        $region43: #{tpu_custom_call.1} parent=39 // pred_region
          %vm289 = vcmask 130048
          %290 = vst.msk [vmem:[#allocation2] sm:$0xff] %vm289, 0.0
        $region44: #{tpu_custom_call.1} parent=39 // pred_fallthru
          _
        %v291 = vld [vmem:[%s271] sm:$0xff]
        %v292 = vld [vmem:[%s275] sm:$0xff]
        %v293 = vld [vmem:[%s275 + $0x8] sm:$0xff]
        %v294 = vld [vmem:[%s278] sm:$0x1]
        %v296 = vperm.slane %v294, 0
        %vm298 = vcmask 130048
        %v300 = vsel %vm298, %v291, 0
        %302 = vmatpush.msra.mxu0 0.0
        %303 = vmatpush.msra.mxu0 0.0
        %304 = vmatpush.msra.mxu0 0.0
        %305 = vmatpush.msra.mxu0 0.0
        %306 = vmatpush.msra.mxu0 0.0
        %307 = vmatpush.msra.mxu0 0.0
        %308 = vmatpush.msra.mxu0 0.0
        %309 = vmatpush.msra.mxu0 0.0
        %310 = vmatpush.msra.mxu0 0.0
        %311 = vmatpush.msra.mxu0 0.0
        %312 = vmatpush.msra.mxu0 0.0
        %313 = vmatpush.msra.mxu0 0.0
        %314 = vmatpush.msra.mxu0 0.0
        %315 = vmatpush.msra.mxu0 0.0
        %316 = vmatpush.msra.mxu0 %v293
        %317 = vmatpush.msra.mxu0 %v292
        %318 = vmatmul.f32.gmra.mxu0 %v300
        %v319 = vpop.f32.mrf.mxu0
        %v320 = vadd.f32 %v296, %v319
        %321 = vdwg.mxu0
        %v322 = vmul.f32 %v320, 0.5
        %v323 = vmul.f32 %v320, 0.70710677
        %v324 = vmul.f32 %v323, %v323
        %v325 = vmin.f32 16.0, %v324
        %v326 = vmul.f32 %v325, 2.1237322e-06
        %v327 = vadd.f32 %v326, 0.00028619796
        %v328 = vmul.f32 %v325, %v327
        %v329 = vadd.f32 %v328, 0.0036580483
        %v330 = vmul.f32 %v325, %v329
        %v331 = vadd.f32 %v330, 0.05243302
        %v332 = vmul.f32 %v325, %v331
        %v333 = vadd.f32 %v332, 0.18741608
        %v334 = vmul.f32 %v325, %v333
        %v335 = vadd.f32 %v334, 1.1283791
        %v336 = vmul.f32 %v323, %v335
        %v337 = vmul.f32 %v325, 3.8918573e-05
        %v338 = vadd.f32 %v337, 0.001143296
        %v339 = vmul.f32 %v325, %v338
        %v340 = vadd.f32 %v339, 0.014752088
        %v341 = vmul.f32 %v325, %v340
        %v342 = vadd.f32 %v341, 0.112945676
        %v343 = vmul.f32 %v325, %v342
        %v344 = vadd.f32 %v343, 0.4994258
        %v345 = vmul.f32 %v325, %v344
        %v346 = vadd.f32 %v345, 1.0
        %v347 = vrcp.pop %v346
        %v348 = vmul.f32 %v346, %v347
        %v349 = vsub.f32 1.0, %v348
        %v350 = vmul.f32 %v347, %v349
        %v351 = vadd.f32 %v347, %v350
        %vm352 = vweird.f32 %v346
        %vm353 = vweird.f32 %v347
        %vm354 = vmor %vm352, %vm353
        %v355 = vsel %vm354, %v347, %v351
        %v356 = vand.u32 2147483647, %v346
        %vm357 = vcmp.eq.f32.partialorder %v356, 8.507059e+37
        %v358 = vand.u32 %v346, 2147483648
        %v359 = vor.u32 1.1754944e-38, %v358
        %v360 = vsel %vm357, %v359, %v355
        %v361 = vmul.f32 %v336, %v360
        %v362 = vmin.f32 %v361, 1.0
        %v363 = vmax.f32 %v362, -1.0
        %v364 = vadd.f32 %v363, 1.0
        %v365 = vmul.f32 %v322, %v364
        %v366 = vld [vmem:[#allocation2] sm:$0xff]
        %v367 = vld [vmem:[%s283] sm:$0xff]
        %v368 = vld [vmem:[%s283 + $0x8] sm:$0xff]
        %v369 = vld [vmem:[%s283 + $0x10] sm:$0xff]
        %v370 = vld [vmem:[%s283 + $0x18] sm:$0xff]
        %vm371 = vcmask 261120
        %v373 = vsel %vm371, %v365, 0
        %375 = vmatpush.msra.mxu0 0.0
        %376 = vmatpush.msra.mxu0 0.0
        %377 = vmatpush.msra.mxu0 0.0
        %378 = vmatpush.msra.mxu0 0.0
        %379 = vmatpush.msra.mxu0 0.0
        %380 = vmatpush.msra.mxu0 0.0
        %381 = vmatpush.msra.mxu0 0.0
        %382 = vmatpush.msra.mxu0 0.0
        %383 = vmatpush.msra.mxu0 0.0
        %384 = vmatpush.msra.mxu0 0.0
        %385 = vmatpush.msra.mxu0 0.0
        %386 = vmatpush.msra.mxu0 0.0
        %387 = vmatpush.msra.mxu0 %v370
        %388 = vmatpush.msra.mxu0 %v369
        %389 = vmatpush.msra.mxu0 %v368
        %390 = vmatpush.msra.mxu0 %v367
        %391 = vmatmul.f32.gmra.mxu0 %v373
        %v392 = vpop.f32.mrf.mxu0
        %v393 = vadd.f32 0.0, %v392
        %394 = vdwg.mxu0
        %v395 = vadd.f32 %v366, %v393
        %396 = vst.msk [vmem:[#allocation2] sm:$0xff] %vm298, %v395
        // Predicated region
        $region45: #{tpu_custom_call.1} parent=39 // pred_check
          %p397 = pneg %p285
        $region46: #{tpu_custom_call.1} parent=39 // pred_check_branch
          %399 = sbr.rel (%p397) target = $region48
        $region47: #{tpu_custom_call.1} parent=39 // pred_region
          %v400 = vld [vmem:[#allocation2] sm:$0xff]
          %v401 = vld [vmem:[%s4] sm:$0x1]
          %v403 = vperm.slane %v401, 0
          %v405 = vadd.f32 %v400, %v403
          %406 = vst.msk [vmem:[%s267] sm:$0xff] %vm298, %v405
        $region48: #{tpu_custom_call.1} parent=39 // pred_fallthru
          _
        %s407 = sand.u32 %s164, 1
        %s408 = scalar_lea.sflag [#allocation4], %s407
        %s409 = sand.u32 %s164, 1
        %s410 = smul.addr %s409, 8
        %s411 = scalar_lea.vmem [#allocation3], %s410
        // Predicated region
        $region49: #{tpu_custom_call.1} parent=39 // pred_check
          %p412 = pneg %p174
        $region50: #{tpu_custom_call.1} parent=39 // pred_check_branch
          %414 = sbr.rel (%p412) target = $region52
        $region51: #{tpu_custom_call.1} parent=39 // pred_region
          %416 = vsyncadd %s408, 0
          %s417 = smul.addr %s23, 8
          %s418 = scalar_lea.hbm %s5, %s417
          %s420 = sshll.u32 %s411, 4
          %s421 = int_to_ptr.vmem [resolvable:$true] %s420
          %s422 = sshll.u32 %s418, 4
          %s423 = int_to_ptr.hbm [resolvable:$true] %s422
          %425 = dma.vmem_to_hbm [thread:$0]  %s421, 128, %s423, %s408
        $region52: #{tpu_custom_call.1} parent=39 // pred_fallthru
          _
      $region40: #{tpu_custom_call.1} parent=5 // pred_fallthru
        _
      %p426 = scmp.le.s32.totalorder 2, %s14
      // Predicated region
      $region53: #{tpu_custom_call.1} parent=5 // pred_check
        %p427 = pneg %p426
      $region54: #{tpu_custom_call.1} parent=5 // pred_check_branch
        %429 = sbr.rel (%p427) target = $region56
      $region55: #{tpu_custom_call.1} parent=5 // pred_region
        %s430 = ssub.s32 %s14, 2
        // Predicated region
        $region57: #{tpu_custom_call.1} parent=55 // pred_check
          %p431 = pneg %p180
        $region58: #{tpu_custom_call.1} parent=55 // pred_check_branch
          %433 = sbr.rel (%p431) target = $region60
        $region59: #{tpu_custom_call.1} parent=55 // pred_region
          %s434 = sand.u32 %s165, 1
          %s435 = scalar_lea.sflag [#allocation4], %s434
          %s436 = sand.u32 %s165, 1
          %s437 = smul.addr %s436, 8
          %s438 = scalar_lea.vmem [#allocation3], %s437
          %440 = dma.done %s435, 128
        $region60: #{tpu_custom_call.1} parent=55 // pred_fallthru
          _
      $region56: #{tpu_custom_call.1} parent=5 // pred_fallthru
        _
    $region6: #{tpu_custom_call.1} parent=1 // loop_footer
      %s18 = sadd.s32 1, %s14
    $region7: #{tpu_custom_call.1} parent=1 // loop_footer_branch
      %13 = sbr.rel target = $region3
    $region8: #{tpu_custom_call.1} parent=1 // loop_exit
      _
    %441 = vsyncpa [#allocation4], 1
    %s442 = scalar_lea.sflag [#allocation4], 1
    %443 = vsyncpa %s442, 1

</llo_original>
